<compile_context>
chip_gen: v6e
topology: v6e:2x2x1
jax: 0.10.0
libtpu: 0.0.40
codegen_flags: <defaults>
</compile_context>

<pallas_src>
import jax
import jax.numpy as jnp
from jax.experimental import pallas as pl
from jax.experimental.pallas import tpu as pltpu


def _round_up(x, m):
    return (x + m - 1) // m * m


def _cdiv(a, b):
    return -(-a // b)


# ----------------------------------------------------------------------------- kernels
def _resblock_kernel_proj(x_ref, w1_ref, t1_ref, w2_ref, t2_ref, ws_ref, o_ref):
    """Shortcut = Linear + BN. BN scale folded into ws; all shifts folded into t2."""
    x = x_ref[...]                                   # already compute_dtype (wrapper cast)

    ident = jnp.dot(x, ws_ref[...], preferred_element_type=jnp.float32)

    h = jnp.dot(x, w1_ref[...], preferred_element_type=jnp.float32) + t1_ref[...]
    h = jnp.maximum(h, 0.0)
    # Dropout is the identity in eval mode.
    out = jnp.dot(h.astype(w2_ref.dtype), w2_ref[...],
                  preferred_element_type=jnp.float32)
    out = out + t2_ref[...] + ident                  # t2 already includes shortcut shift
    o_ref[...] = jnp.maximum(out, 0.0).astype(o_ref.dtype)


def _resblock_kernel_identity(x_ref, w1_ref, t1_ref, w2_ref, t2_ref, o_ref):
    """Shortcut = identity (in_features == out_features): no shortcut matmul at all."""
    x = x_ref[...]

    h = jnp.dot(x, w1_ref[...], preferred_element_type=jnp.float32) + t1_ref[...]
    h = jnp.maximum(h, 0.0)
    # Dropout is the identity in eval mode.
    out = jnp.dot(h.astype(w2_ref.dtype), w2_ref[...],
                  preferred_element_type=jnp.float32) + t2_ref[...]
    out = out + x.astype(jnp.float32)
    o_ref[...] = jnp.maximum(out, 0.0).astype(o_ref.dtype)


# ----------------------------------------------------------------------------- param prep
def _bn_fold(gamma, beta, mean, var, eps=1e-5):
    scale = gamma / jnp.sqrt(var + eps)
    shift = beta - mean * scale
    return scale, shift


def _fold_linear_bn(w, b, gamma, beta, mean, var, eps=1e-5):
    """(x @ w + b) * s + t  ==  x @ (w * s) + (b * s + t)."""
    s, t = _bn_fold(gamma, beta, mean, var, eps)
    return w * s[None, :], (b * s + t)[None, :]


def prepare_params(params, *, compute_dtype=jnp.bfloat16, eps=1e-5):
    """One-time prep: fold BN + biases, pad feature axes to 128, cast weights.

    Returns a dict of kernel-ready tensors + metadata. Do this once per model, not
    per forward call.
    """
    in_f, out_f = params["w1"].shape
    has_proj = in_f != out_f

    w1, t1 = _fold_linear_bn(params["w1"], params["b1"], params["bn1_gamma"],
                             params["bn1_beta"], params["bn1_mean"],
                             params["bn1_var"], eps)
    w2, t2 = _fold_linear_bn(params["w2"], params["b2"], params["bn2_gamma"],
                             params["bn2_beta"], params["bn2_mean"],
                             params["bn2_var"], eps)
    ws = None
    if has_proj:
        ws, ts = _fold_linear_bn(params["ws"], params["bs"], params["bns_gamma"],
                                 params["bns_beta"], params["bns_mean"],
                                 params["bns_var"], eps)
        t2 = t2 + ts  # fold shortcut shift into the second shift -> one fewer kernel add

    # Pad feature axes to lane width (128) -> unmasked lane-dense stores, full MXU tiles.
    in_fp = _round_up(in_f, 128)
    out_fp = _round_up(out_f, 128)

    def pad2(a, r, c):
        return jnp.pad(a, ((0, r - a.shape[0]), (0, c - a.shape[1])))

    prep = {
        "w1": pad2(w1, in_fp, out_fp).astype(compute_dtype),
        "t1": pad2(t1, 1, out_fp).astype(jnp.float32),
        "w2": pad2(w2, out_fp, out_fp).astype(compute_dtype),
        "t2": pad2(t2, 1, out_fp).astype(jnp.float32),
        "ws": pad2(ws, in_fp, out_fp).astype(compute_dtype) if has_proj else None,
        "in_f": in_f, "out_f": out_f, "in_fp": in_fp, "out_fp": out_fp,
        "has_proj": has_proj, "compute_dtype": compute_dtype,
    }
    return prep


# ----------------------------------------------------------------------------- wrapper
def _vmem_limit_bytes():
    """Per-generation VMEM budget: ~80% of capacity, capped at 112 MiB."""
    try:
        cap = int(pltpu.get_tpu_info().vmem_capacity_bytes)
    except Exception:
        cap = 64 * 1024 * 1024  # conservative (v7x per-TC) fallback
    return min(int(cap * 0.8), 112 * 1024 * 1024)


def _choose_block_m(n, row_align, max_block=512):
    """Balanced batch tiling: avoid round_up(n, 512) padding waste; give the grid at
    least 2 steps for decently sized batches so v7x's two TCs both get work."""
    steps = max(1, _cdiv(n, max_block))
    if steps == 1 and n >= 256:
        steps = 2
    block_m = _round_up(_cdiv(n, steps), row_align)
    return block_m, steps


def residual_block(x, prep, *, block_m=None, single_buffer_weights=True):
    """x: (N, in_features). prep: output of prepare_params()."""
    n, in_f = x.shape
    assert in_f == prep["in_f"], "input feature size mismatch with prepared params"
    in_fp, out_fp, out_f = prep["in_fp"], prep["out_fp"], prep["out_f"]
    compute_dtype = prep["compute_dtype"]
    has_proj = prep["has_proj"]

    # Row alignment follows sublane packing of the compute dtype (8 f32 / 16 bf16 / 32 fp8).
    row_align = max(8, 32 // jnp.dtype(compute_dtype).itemsize)
    if block_m is None:
        block_m, steps = _choose_block_m(n, row_align)
    else:
        block_m = _round_up(block_m, row_align)
        steps = _cdiv(n, block_m)
    n_pad = steps * block_m

    xp = jnp.pad(x, ((0, n_pad - n), (0, in_fp - in_f))).astype(compute_dtype)

    row_spec = pl.BlockSpec((block_m, in_fp), lambda i: (i, 0))
    out_spec = pl.BlockSpec((block_m, out_fp), lambda i: (i, 0))

    def resident(shape):
        # Constant index_map -> fetched once; single buffer halves weight VMEM footprint.
        if single_buffer_weights:
            try:
                return pl.BlockSpec(shape, lambda i: (0, 0),
                                    pipeline_mode=pl.Buffered(1))
            except Exception:
                pass
        return pl.BlockSpec(shape, lambda i: (0, 0))

    in_specs = [row_spec,
                resident((in_fp, out_fp)), resident((1, out_fp)),
                resident((out_fp, out_fp)), resident((1, out_fp))]
    args = [xp, prep["w1"], prep["t1"], prep["w2"], prep["t2"]]
    if has_proj:
        in_specs.append(resident((in_fp, out_fp)))
        args.append(prep["ws"])
        kernel = _resblock_kernel_proj
    else:
        kernel = _resblock_kernel_identity

    out = pl.pallas_call(
        kernel,
        out_shape=jax.ShapeDtypeStruct((n_pad, out_fp), x.dtype),
        grid_spec=pltpu.PrefetchScalarGridSpec(
            num_scalar_prefetch=0,
            grid=(steps,),
            in_specs=in_specs,
            out_specs=out_spec,
        ),
        compiler_params=pltpu.CompilerParams(
            dimension_semantics=("parallel",),      # batch axis shards across TCs (v7x)
            vmem_limit_bytes=_vmem_limit_bytes(),   # per-generation budget
        ),
    )(*args)

    return out[:n, :out_f]


# ----------------------------------------------------------------------------- test glue
def make_params(key, in_f, out_f):
    ks = jax.random.split(key, 8)
    p = {
        "w1": jax.random.normal(ks[0], (in_f, out_f), jnp.float32) * 0.1,
        "b1": jax.random.normal(ks[1], (out_f,), jnp.float32) * 0.1,
        "w2": jax.random.normal(ks[2], (out_f, out_f), jnp.float32) * 0.1,
        "b2": jax.random.normal(ks[3], (out_f,), jnp.float32) * 0.1,
        "bn1_gamma": 1.0 + 0.1 * jax.random.normal(ks[4], (out_f,), jnp.float32),
        "bn1_beta": 0.05 * jnp.arange(out_f, dtype=jnp.float32),
        "bn1_mean": 0.01 * jnp.arange(out_f, dtype=jnp.float32),
        "bn1_var": jnp.ones((out_f,), jnp.float32) * 1.5,
        "bn2_gamma": 1.0 + 0.1 * jax.random.normal(ks[5], (out_f,), jnp.float32),
        "bn2_beta": -0.03 * jnp.arange(out_f, dtype=jnp.float32),
        "bn2_mean": 0.02 * jnp.arange(out_f, dtype=jnp.float32),
        "bn2_var": jnp.ones((out_f,), jnp.float32) * 0.8,
    }
    if in_f != out_f:
        p["ws"] = jax.random.normal(ks[6], (in_f, out_f), jnp.float32) * 0.1
        p["bs"] = jax.random.normal(ks[7], (out_f,), jnp.float32) * 0.1
        p["bns_gamma"] = 1.0 + 0.05 * jax.random.normal(ks[4], (out_f,), jnp.float32)
        p["bns_beta"] = 0.01 * jnp.arange(out_f, dtype=jnp.float32)
        p["bns_mean"] = 0.005 * jnp.arange(out_f, dtype=jnp.float32)
        p["bns_var"] = jnp.ones((out_f,), jnp.float32) * 1.2
    return p


def residual_block_ref(x, params):
    """Pure-JAX reference (eval-mode PyTorch semantics)."""
    in_f = x.shape[1]
    out_f = params["w1"].shape[1]
    s1, t1 = _bn_fold(params["bn1_gamma"], params["bn1_beta"],
                      params["bn1_mean"], params["bn1_var"])
    s2, t2 = _bn_fold(params["bn2_gamma"], params["bn2_beta"],
                      params["bn2_mean"], params["bn2_var"])
    if in_f != out_f:
        ss, ts = _bn_fold(params["bns_gamma"], params["bns_beta"],
                          params["bns_mean"], params["bns_var"])
        ident = (x @ params["ws"] + params["bs"]) * ss + ts
    else:
        ident = x
    h = jnp.maximum((x @ params["w1"] + params["b1"]) * s1 + t1, 0.0)
    out = (h @ params["w2"] + params["b2"]) * s2 + t2
    return jnp.maximum(out + ident, 0.0)


if __name__ == "__main__":
    key = jax.random.PRNGKey(0)
    k_x, k_p1, k_p2 = jax.random.split(key, 3)

    # Projection-shortcut block (in != out), small toy shapes.
    batch, in_features, out_features = 16, 32, 64
    x = jax.random.normal(k_x, (batch, in_features), jnp.float32)
    params = make_params(k_p1, in_features, out_features)
    ref = residual_block_ref(x, params)

    # f32-weight path: tight tolerance check of the fused kernel.
    prep_f32 = prepare_params(params, compute_dtype=jnp.float32)
    out_f32 = jax.block_until_ready(residual_block(x, prep_f32))
    assert out_f32.shape == (batch, out_features)
    assert jnp.allclose(out_f32, ref, atol=1e-4, rtol=1e-4), "proj-shortcut f32 mismatch"

    # Default bf16-weight path (MXU-native, f32 accumulation): looser tolerance.
    prep_bf16 = prepare_params(params)  # compute_dtype defaults to bf16
    out_bf16 = jax.block_until_ready(residual_block(x, prep_bf16))
    assert jnp.allclose(out_bf16, ref, atol=1e-1, rtol=5e-2), "proj-shortcut bf16 mismatch"

    # Identity-shortcut block (in == out) exercises the no-projection kernel,
    # with a batch that is not a multiple of 8 (exercises the padding path).
    params_id = make_params(k_p2, out_features, out_features)
    x2 = ref[:10]
    ref2 = residual_block_ref(x2, params_id)
    prep_id = prepare_params(params_id, compute_dtype=jnp.float32)
    out2 = jax.block_until_ready(residual_block(x2, prep_id))
    assert out2.shape == (10, out_features)
    assert jnp.allclose(out2, ref2, atol=1e-4, rtol=1e-4), "identity-shortcut mismatch"

    prep_id_bf16 = prepare_params(params_id)
    out2_bf16 = jax.block_until_ready(residual_block(x2, prep_id_bf16))
    assert jnp.allclose(out2_bf16, ref2, atol=1e-1, rtol=5e-2), "identity bf16 mismatch"

    print("KERNEL_OK")
</pallas_src>

<mosaic_0001>
module attributes {stable_mosaic.version = 11 : i64} {
  func.func @_resblock_kernel_proj(%arg0: i32, %arg1: memref<16x128xf32, #tpu.memory_space<vmem>>, %arg2: memref<128x128xf32, #tpu.memory_space<vmem>>, %arg3: memref<1x128xf32, #tpu.memory_space<vmem>>, %arg4: memref<128x128xf32, #tpu.memory_space<vmem>>, %arg5: memref<1x128xf32, #tpu.memory_space<vmem>>, %arg6: memref<128x128xf32, #tpu.memory_space<vmem>>, %arg7: memref<16x128xf32, #tpu.memory_space<vmem>>) attributes {dimension_semantics = [#tpu.dimension_semantics<parallel>], iteration_bounds = array<i64: 1>, scalar_prefetch = 0 : i64, scratch_operands = 0 : i64, tpu.core_type = #tpu.core_type<tc>, window_params = [{transform_indices = @transform_0, window_bounds = array<i64: 16, 128>}, {pipeline_mode = #tpu.pipeline_mode<synchronous>, transform_indices = @transform_1, window_bounds = array<i64: 128, 128>}, {pipeline_mode = #tpu.pipeline_mode<synchronous>, transform_indices = @transform_2, window_bounds = array<i64: 1, 128>}, {pipeline_mode = #tpu.pipeline_mode<synchronous>, transform_indices = @transform_3, window_bounds = array<i64: 128, 128>}, {pipeline_mode = #tpu.pipeline_mode<synchronous>, transform_indices = @transform_4, window_bounds = array<i64: 1, 128>}, {pipeline_mode = #tpu.pipeline_mode<synchronous>, transform_indices = @transform_5, window_bounds = array<i64: 128, 128>}, {transform_indices = @transform_6, window_bounds = array<i64: 16, 128>}]} {
    %c0 = arith.constant 0 : index
    %c0_0 = arith.constant 0 : index
    %0 = vector.load %arg1[%c0, %c0_0] : memref<16x128xf32, #tpu.memory_space<vmem>>, vector<16x128xf32>
    %c0_1 = arith.constant 0 : index
    %c0_2 = arith.constant 0 : index
    %1 = vector.load %arg6[%c0_1, %c0_2] : memref<128x128xf32, #tpu.memory_space<vmem>>, vector<128x128xf32>
    %cst = arith.constant dense<0.000000e+00> : vector<16x128xf32>
    %2 = tpu.matmul %0, %1, %cst {dimension_numbers = #tpu.dot_dimension_numbers<[1], [0], [0], [1], [0, 0, 1, 1], [], []>} : vector<16x128xf32>, vector<128x128xf32>, vector<16x128xf32> -> vector<16x128xf32>
    %c0_3 = arith.constant 0 : index
    %c0_4 = arith.constant 0 : index
    %3 = vector.load %arg2[%c0_3, %c0_4] : memref<128x128xf32, #tpu.memory_space<vmem>>, vector<128x128xf32>
    %cst_5 = arith.constant dense<0.000000e+00> : vector<16x128xf32>
    %4 = tpu.matmul %0, %3, %cst_5 {dimension_numbers = #tpu.dot_dimension_numbers<[1], [0], [0], [1], [0, 0, 1, 1], [], []>} : vector<16x128xf32>, vector<128x128xf32>, vector<16x128xf32> -> vector<16x128xf32>
    %c0_6 = arith.constant 0 : index
    %c0_7 = arith.constant 0 : index
    %5 = vector.load %arg3[%c0_6, %c0_7] : memref<1x128xf32, #tpu.memory_space<vmem>>, vector<1x128xf32>
    %6 = vector.broadcast %5 : vector<1x128xf32> to vector<16x128xf32>
    %7 = arith.addf %4, %6 : vector<16x128xf32>
    %cst_8 = arith.constant 0.000000e+00 : f32
    %8 = vector.broadcast %cst_8 : f32 to vector<16x128xf32>
    %9 = arith.maximumf %7, %8 : vector<16x128xf32>
    %c0_9 = arith.constant 0 : index
    %c0_10 = arith.constant 0 : index
    %10 = vector.load %arg4[%c0_9, %c0_10] : memref<128x128xf32, #tpu.memory_space<vmem>>, vector<128x128xf32>
    %cst_11 = arith.constant dense<0.000000e+00> : vector<16x128xf32>
    %11 = tpu.matmul %9, %10, %cst_11 {dimension_numbers = #tpu.dot_dimension_numbers<[1], [0], [0], [1], [0, 0, 1, 1], [], []>} : vector<16x128xf32>, vector<128x128xf32>, vector<16x128xf32> -> vector<16x128xf32>
    %c0_12 = arith.constant 0 : index
    %c0_13 = arith.constant 0 : index
    %12 = vector.load %arg5[%c0_12, %c0_13] : memref<1x128xf32, #tpu.memory_space<vmem>>, vector<1x128xf32>
    %13 = vector.broadcast %12 : vector<1x128xf32> to vector<16x128xf32>
    %14 = arith.addf %11, %13 : vector<16x128xf32>
    %15 = arith.addf %14, %2 : vector<16x128xf32>
    %cst_14 = arith.constant 0.000000e+00 : f32
    %16 = vector.broadcast %cst_14 : f32 to vector<16x128xf32>
    %17 = arith.maximumf %15, %16 : vector<16x128xf32>
    %c0_15 = arith.constant 0 : index
    %c0_16 = arith.constant 0 : index
    %18 = vector.load %arg7[%c0_15, %c0_16] : memref<16x128xf32, #tpu.memory_space<vmem>>, vector<16x128xf32>
    tpu.vector_store %arg7[%c0_15, %c0_16], %17 {strides = array<i32>} : memref<16x128xf32, #tpu.memory_space<vmem>>, vector<16x128xf32>,
    return
  }
  func.func @transform_0(%arg0: i32) -> (i32, i32) {
    %c0_i32 = arith.constant 0 : i32
    %c0_i32_0 = arith.constant 0 : i32
    return %arg0, %c0_i32 : i32, i32
  }
  func.func @transform_1(%arg0: i32) -> (i32, i32) {
    %c0_i32 = arith.constant 0 : i32
    %c0_i32_0 = arith.constant 0 : i32
    %c0_i32_1 = arith.constant 0 : i32
    return %c0_i32, %c0_i32_0 : i32, i32
  }
  func.func @transform_2(%arg0: i32) -> (i32, i32) {
    %c0_i32 = arith.constant 0 : i32
    %c0_i32_0 = arith.constant 0 : i32
    %c0_i32_1 = arith.constant 0 : i32
    return %c0_i32, %c0_i32_0 : i32, i32
  }
  func.func @transform_3(%arg0: i32) -> (i32, i32) {
    %c0_i32 = arith.constant 0 : i32
    %c0_i32_0 = arith.constant 0 : i32
    %c0_i32_1 = arith.constant 0 : i32
    return %c0_i32, %c0_i32_0 : i32, i32
  }
  func.func @transform_4(%arg0: i32) -> (i32, i32) {
    %c0_i32 = arith.constant 0 : i32
    %c0_i32_0 = arith.constant 0 : i32
    %c0_i32_1 = arith.constant 0 : i32
    return %c0_i32, %c0_i32_0 : i32, i32
  }
  func.func @transform_5(%arg0: i32) -> (i32, i32) {
    %c0_i32 = arith.constant 0 : i32
    %c0_i32_0 = arith.constant 0 : i32
    %c0_i32_1 = arith.constant 0 : i32
    return %c0_i32, %c0_i32_0 : i32, i32
  }
  func.func @transform_6(%arg0: i32) -> (i32, i32) {
    %c0_i32 = arith.constant 0 : i32
    %c0_i32_0 = arith.constant 0 : i32
    return %arg0, %c0_i32 : i32, i32
  }
}

</mosaic_0001>

<llo_original>
// kernel: tpu_custom_call.1
$region0: #{tpu_custom_call.1}
  #allocation0 [shape = 'u32[]', space=smem, size = 0x4, offset = 0x4, fixed_abs, tag = 'smem constant byte address 0x4 - core index']
  #allocation1 [shape = 'u32[144,128]{1,0:T(1,128)}', space=vmem, size = 0x12000, scoped, tag = 'internal scratch']
  %s0 = inlined_call_operand.hbm [shape: f32[16,128], index: 0, kind: input, shape index: {}]
  %s1 = inlined_call_operand.hbm [shape: f32[128,128], index: 1, kind: input, shape index: {}]
  %s2 = inlined_call_operand.vmem [shape: f32[1,128], index: 2, kind: input, shape index: {}]
  %s3 = inlined_call_operand.hbm [shape: f32[128,128], index: 3, kind: input, shape index: {}]
  %s4 = inlined_call_operand.vmem [shape: f32[1,128], index: 4, kind: input, shape index: {}]
  %s5 = inlined_call_operand.hbm [shape: f32[128,128], index: 5, kind: input, shape index: {}]
  %s6 = inlined_call_operand.hbm [shape: f32[16,128], index: 6, kind: output, shape index: {}]
  %s7 = sld [smem:[#allocation0]]
  $region50: #{tpu_custom_call.1} parent=0
    _
  %s9 = ssub.s32 1, %s7
  %s10 = scalar_select 0, %s9, %s7
  $region1: #{tpu_custom_call.1} parent=0
    #allocation2 [shape = 'u8[8192]{0}', space=vmem, size = 0x2000, scoped, tag = 'input window, operand 0, single buffered']
    #allocation3 [shape = 's32[1]{0}', space=sflag, size = 0x4, scoped, tag = 'scoped memory for tpu_custom_call.1']
    #allocation4 [shape = 's32[1]{0}', space=sflag, size = 0x4, scoped, tag = 'scoped memory for tpu_custom_call.1']
    #allocation5 [shape = 'u8[65536]{0}', space=vmem, size = 0x10000, scoped, tag = 'input window, operand 1, single buffered']
    #allocation6 [shape = 's32[1]{0}', space=sflag, size = 0x4, scoped, tag = 'scoped memory for tpu_custom_call.1']
    #allocation7 [shape = 'u8[65536]{0}', space=vmem, size = 0x10000, scoped, tag = 'input window, operand 3, single buffered']
    #allocation8 [shape = 'u8[65536]{0}', space=vmem, size = 0x10000, scoped, tag = 'input window, operand 5, single buffered']
    #allocation9 [shape = 's32[1]{0}', space=sflag, size = 0x4, scoped, tag = 'scoped memory for tpu_custom_call.1']
    #allocation10 [shape = 'u8[8192]{0}', space=vmem, size = 0x2000, scoped, tag = 'output window, operand 0, single buffered']
    %11 = vsyncpa [#allocation3], 0
    %12 = vsyncpa [#allocation6], 0
    %13 = vsyncpa [#allocation9], 0
    %14 = vsyncpa [#allocation4], 0
    // Predicated region
    $region2: #{tpu_custom_call.1} parent=1 // pred_check
      _
    $region3: #{tpu_custom_call.1} parent=1 // pred_check_branch
      %16 = sbr.rel (0) target = $region5
    $region4: #{tpu_custom_call.1} parent=1 // pred_region
      %s18 = ssub.s32 256, 256
      %19 = vsyncadd [#allocation3], %s18
      %s20 = sshll.u32 [#allocation2], 4
      %s21 = int_to_ptr.vmem [resolvable:$true] %s20
      %26 = dma.hbm_to_vmem [thread:$0]  %s0, 256, %s21, [#allocation3], 128, 128, 8
    $region5: #{tpu_custom_call.1} parent=1 // pred_fallthru
      _
    // Predicated region
    $region6: #{tpu_custom_call.1} parent=1 // pred_check
      _
    $region7: #{tpu_custom_call.1} parent=1 // pred_check_branch
      %28 = sbr.rel (0) target = $region9
    $region8: #{tpu_custom_call.1} parent=1 // pred_region
      %s30 = ssub.s32 2048, 2048
      %31 = vsyncadd [#allocation6], %s30
      %s32 = sshll.u32 [#allocation5], 4
      %s33 = int_to_ptr.vmem [resolvable:$true] %s32
      %38 = dma.hbm_to_vmem [thread:$0]  %s1, 2048, %s33, [#allocation6], 128, 128, 8
    $region9: #{tpu_custom_call.1} parent=1 // pred_fallthru
      _
    // Predicated region
    $region10: #{tpu_custom_call.1} parent=1 // pred_check
      _
    $region11: #{tpu_custom_call.1} parent=1 // pred_check_branch
      %40 = sbr.rel (0) target = $region13
    $region12: #{tpu_custom_call.1} parent=1 // pred_region
      _
    $region13: #{tpu_custom_call.1} parent=1 // pred_fallthru
      _
    // Predicated region
    $region14: #{tpu_custom_call.1} parent=1 // pred_check
      _
    $region15: #{tpu_custom_call.1} parent=1 // pred_check_branch
      %42 = sbr.rel (0) target = $region17
    $region16: #{tpu_custom_call.1} parent=1 // pred_region
      %s44 = ssub.s32 2048, 2048
      %45 = vsyncadd [#allocation6], %s44
      %s46 = sshll.u32 [#allocation7], 4
      %s47 = int_to_ptr.vmem [resolvable:$true] %s46
      %52 = dma.hbm_to_vmem [thread:$0]  %s3, 2048, %s47, [#allocation6], 128, 128, 8
    $region17: #{tpu_custom_call.1} parent=1 // pred_fallthru
      _
    // Predicated region
    $region18: #{tpu_custom_call.1} parent=1 // pred_check
      _
    $region19: #{tpu_custom_call.1} parent=1 // pred_check_branch
      %54 = sbr.rel (0) target = $region21
    $region20: #{tpu_custom_call.1} parent=1 // pred_region
      _
    $region21: #{tpu_custom_call.1} parent=1 // pred_fallthru
      _
    // Predicated region
    $region22: #{tpu_custom_call.1} parent=1 // pred_check
      _
    $region23: #{tpu_custom_call.1} parent=1 // pred_check_branch
      %56 = sbr.rel (0) target = $region25
    $region24: #{tpu_custom_call.1} parent=1 // pred_region
      %s58 = ssub.s32 2048, 2048
      %59 = vsyncadd [#allocation9], %s58
      %s60 = sshll.u32 [#allocation8], 4
      %s61 = int_to_ptr.vmem [resolvable:$true] %s60
      %66 = dma.hbm_to_vmem [thread:$0]  %s5, 2048, %s61, [#allocation9], 128, 128, 8
    $region25: #{tpu_custom_call.1} parent=1 // pred_fallthru
      _
    // Predicated region
    $region26: #{tpu_custom_call.1} parent=1 // pred_check
      _
    $region27: #{tpu_custom_call.1} parent=1 // pred_check_branch
      %68 = sbr.rel (0) target = $region29
    $region28: #{tpu_custom_call.1} parent=1 // pred_region
      %69 = dma.done [#allocation3], 256
    $region29: #{tpu_custom_call.1} parent=1 // pred_fallthru
      _
    // Predicated region
    $region30: #{tpu_custom_call.1} parent=1 // pred_check
      _
    $region31: #{tpu_custom_call.1} parent=1 // pred_check_branch
      %71 = sbr.rel (0) target = $region33
    $region32: #{tpu_custom_call.1} parent=1 // pred_region
      %72 = dma.done [#allocation6], 2048
    $region33: #{tpu_custom_call.1} parent=1 // pred_fallthru
      _
    // Predicated region
    $region34: #{tpu_custom_call.1} parent=1 // pred_check
      _
    $region35: #{tpu_custom_call.1} parent=1 // pred_check_branch
      %74 = sbr.rel (0) target = $region37
    $region36: #{tpu_custom_call.1} parent=1 // pred_region
      %75 = dma.done [#allocation6], 2048
    $region37: #{tpu_custom_call.1} parent=1 // pred_fallthru
      _
    // Predicated region
    $region38: #{tpu_custom_call.1} parent=1 // pred_check
      _
    $region39: #{tpu_custom_call.1} parent=1 // pred_check_branch
      %77 = sbr.rel (0) target = $region41
    $region40: #{tpu_custom_call.1} parent=1 // pred_region
      %78 = dma.done [#allocation9], 2048
    $region41: #{tpu_custom_call.1} parent=1 // pred_fallthru
      _
    %v79 = vld [vmem:[#allocation2] sm:$0xff]
    %v80 = vld [vmem:[#allocation2 + $0x8] sm:$0xff]
    %v81 = vld [vmem:[#allocation8] sm:$0xff]
    %v82 = vld [vmem:[#allocation8 + $0x8] sm:$0xff]
    %v83 = vld [vmem:[#allocation8 + $0x10] sm:$0xff]
    %v84 = vld [vmem:[#allocation8 + $0x18] sm:$0xff]
    %v85 = vld [vmem:[#allocation8 + $0x20] sm:$0xff]
    %v86 = vld [vmem:[#allocation8 + $0x28] sm:$0xff]
    %v87 = vld [vmem:[#allocation8 + $0x30] sm:$0xff]
    %v88 = vld [vmem:[#allocation8 + $0x38] sm:$0xff]
    %v89 = vld [vmem:[#allocation8 + $0x40] sm:$0xff]
    %v90 = vld [vmem:[#allocation8 + $0x48] sm:$0xff]
    %v91 = vld [vmem:[#allocation8 + $0x50] sm:$0xff]
    %v92 = vld [vmem:[#allocation8 + $0x58] sm:$0xff]
    %v93 = vld [vmem:[#allocation8 + $0x60] sm:$0xff]
    %v94 = vld [vmem:[#allocation8 + $0x68] sm:$0xff]
    %v95 = vld [vmem:[#allocation8 + $0x70] sm:$0xff]
    %v96 = vld [vmem:[#allocation8 + $0x78] sm:$0xff]
    %97 = vmatprep.subr.mxu0 0.0
    %98 = vmatpush1.msra.mxu0 %v96
    %99 = vmatprep.subr.mxu0 0.0
    %100 = vmatpush1.msra.mxu0 %v95
    %101 = vmatprep.subr.mxu0 0.0
    %102 = vmatpush1.msra.mxu0 %v94
    %103 = vmatprep.subr.mxu0 0.0
    %104 = vmatpush1.msra.mxu0 %v93
    %105 = vmatprep.subr.mxu0 0.0
    %106 = vmatpush1.msra.mxu0 %v92
    %107 = vmatprep.subr.mxu0 0.0
    %108 = vmatpush1.msra.mxu0 %v91
    %109 = vmatprep.subr.mxu0 0.0
    %110 = vmatpush1.msra.mxu0 %v90
    %111 = vmatprep.subr.mxu0 0.0
    %112 = vmatpush1.msra.mxu0 %v89
    %113 = vmatprep.subr.mxu0 0.0
    %114 = vmatpush1.msra.mxu0 %v88
    %115 = vmatprep.subr.mxu0 0.0
    %116 = vmatpush1.msra.mxu0 %v87
    %117 = vmatprep.subr.mxu0 0.0
    %118 = vmatpush1.msra.mxu0 %v86
    %119 = vmatprep.subr.mxu0 0.0
    %120 = vmatpush1.msra.mxu0 %v85
    %121 = vmatprep.subr.mxu0 0.0
    %122 = vmatpush1.msra.mxu0 %v84
    %123 = vmatprep.subr.mxu0 0.0
    %124 = vmatpush1.msra.mxu0 %v83
    %125 = vmatprep.subr.mxu0 0.0
    %126 = vmatpush1.msra.mxu0 %v82
    %127 = vmatprep.subr.mxu0 0.0
    %128 = vmatpush1.msra.mxu0 %v81
    %129 = vmatprep.subr.mxu0 0.0
    %130 = vmatpush2.msra.mxu0 0.0
    %131 = vmatprep.subr.mxu0 0.0
    %132 = vmatpush2.msra.mxu0 0.0
    %133 = vmatprep.subr.mxu0 0.0
    %134 = vmatpush2.msra.mxu0 0.0
    %135 = vmatprep.subr.mxu0 0.0
    %136 = vmatpush2.msra.mxu0 0.0
    %137 = vmatprep.subr.mxu0 0.0
    %138 = vmatpush2.msra.mxu0 0.0
    %139 = vmatprep.subr.mxu0 0.0
    %140 = vmatpush2.msra.mxu0 0.0
    %141 = vmatprep.subr.mxu0 0.0
    %142 = vmatpush2.msra.mxu0 0.0
    %143 = vmatprep.subr.mxu0 0.0
    %144 = vmatpush2.msra.mxu0 0.0
    %145 = vmatprep.subr.mxu0 0.0
    %146 = vmatpush2.msra.mxu0 0.0
    %147 = vmatprep.subr.mxu0 0.0
    %148 = vmatpush2.msra.mxu0 0.0
    %149 = vmatprep.subr.mxu0 0.0
    %150 = vmatpush2.msra.mxu0 0.0
    %151 = vmatprep.subr.mxu0 0.0
    %152 = vmatpush2.msra.mxu0 0.0
    %153 = vmatprep.subr.mxu0 0.0
    %154 = vmatpush2.msra.mxu0 0.0
    %155 = vmatprep.subr.mxu0 0.0
    %156 = vmatpush2.msra.mxu0 0.0
    %157 = vmatprep.subr.mxu0 0.0
    %158 = vmatpush2.msra.mxu0 0.0
    %159 = vmatprep.subr.mxu0 0.0
    %160 = vmatpush2.msra.mxu0 0.0
    %161 = vmatprep.mubr.f32.mxu0 0.0
    %162 = vmatmul.mubr.f32.gmra.mxu0 %v79
    %v163 = vpop.f32.mrf.mxu0
    %v164 = vadd.f32 0.0, %v163
    %v165 = vpop.f32.mrf.mxu0
    %166 = vmatprep.mubr.f32.mxu0 0.0
    %167 = vmatmul.mubr.f32.gmra.mxu0 %v80
    %v168 = vpop.f32.mrf.mxu0
    %v169 = vadd.f32 0.0, %v168
    %v170 = vpop.f32.mrf.mxu0
    %171 = vdwg.mxu0
    %v172 = vld [vmem:[#allocation5] sm:$0xff]
    %v173 = vld [vmem:[#allocation5 + $0x8] sm:$0xff]
    %v174 = vld [vmem:[#allocation5 + $0x10] sm:$0xff]
    %v175 = vld [vmem:[#allocation5 + $0x18] sm:$0xff]
    %v176 = vld [vmem:[#allocation5 + $0x20] sm:$0xff]
    %v177 = vld [vmem:[#allocation5 + $0x28] sm:$0xff]
    %v178 = vld [vmem:[#allocation5 + $0x30] sm:$0xff]
    %v179 = vld [vmem:[#allocation5 + $0x38] sm:$0xff]
    %v180 = vld [vmem:[#allocation5 + $0x40] sm:$0xff]
    %v181 = vld [vmem:[#allocation5 + $0x48] sm:$0xff]
    %v182 = vld [vmem:[#allocation5 + $0x50] sm:$0xff]
    %v183 = vld [vmem:[#allocation5 + $0x58] sm:$0xff]
    %v184 = vld [vmem:[#allocation5 + $0x60] sm:$0xff]
    %v185 = vld [vmem:[#allocation5 + $0x68] sm:$0xff]
    %v186 = vld [vmem:[#allocation5 + $0x70] sm:$0xff]
    %v187 = vld [vmem:[#allocation5 + $0x78] sm:$0xff]
    %v188 = vld [vmem:[%s2] sm:$0x1]
    %v190 = vlaneseq
    %v191 = vshrl.u32 %v190, 7
    %v192 = vsub.s32 0, %v191
    %v193 = vrot.slane %v188, %v192
    %195 = vmatprep.subr.mxu0 0.0
    %196 = vmatpush1.msra.mxu0 %v187
    %197 = vmatprep.subr.mxu0 0.0
    %198 = vmatpush1.msra.mxu0 %v186
    %199 = vmatprep.subr.mxu0 0.0
    %200 = vmatpush1.msra.mxu0 %v185
    %201 = vmatprep.subr.mxu0 0.0
    %202 = vmatpush1.msra.mxu0 %v184
    %203 = vmatprep.subr.mxu0 0.0
    %204 = vmatpush1.msra.mxu0 %v183
    %205 = vmatprep.subr.mxu0 0.0
    %206 = vmatpush1.msra.mxu0 %v182
    %207 = vmatprep.subr.mxu0 0.0
    %208 = vmatpush1.msra.mxu0 %v181
    %209 = vmatprep.subr.mxu0 0.0
    %210 = vmatpush1.msra.mxu0 %v180
    %211 = vmatprep.subr.mxu0 0.0
    %212 = vmatpush1.msra.mxu0 %v179
    %213 = vmatprep.subr.mxu0 0.0
    %214 = vmatpush1.msra.mxu0 %v178
    %215 = vmatprep.subr.mxu0 0.0
    %216 = vmatpush1.msra.mxu0 %v177
    %217 = vmatprep.subr.mxu0 0.0
    %218 = vmatpush1.msra.mxu0 %v176
    %219 = vmatprep.subr.mxu0 0.0
    %220 = vmatpush1.msra.mxu0 %v175
    %221 = vmatprep.subr.mxu0 0.0
    %222 = vmatpush1.msra.mxu0 %v174
    %223 = vmatprep.subr.mxu0 0.0
    %224 = vmatpush1.msra.mxu0 %v173
    %225 = vmatprep.subr.mxu0 0.0
    %226 = vmatpush1.msra.mxu0 %v172
    %227 = vmatprep.subr.mxu0 0.0
    %228 = vmatpush2.msra.mxu0 0.0
    %229 = vmatprep.subr.mxu0 0.0
    %230 = vmatpush2.msra.mxu0 0.0
    %231 = vmatprep.subr.mxu0 0.0
    %232 = vmatpush2.msra.mxu0 0.0
    %233 = vmatprep.subr.mxu0 0.0
    %234 = vmatpush2.msra.mxu0 0.0
    %235 = vmatprep.subr.mxu0 0.0
    %236 = vmatpush2.msra.mxu0 0.0
    %237 = vmatprep.subr.mxu0 0.0
    %238 = vmatpush2.msra.mxu0 0.0
    %239 = vmatprep.subr.mxu0 0.0
    %240 = vmatpush2.msra.mxu0 0.0
    %241 = vmatprep.subr.mxu0 0.0
    %242 = vmatpush2.msra.mxu0 0.0
    %243 = vmatprep.subr.mxu0 0.0
    %244 = vmatpush2.msra.mxu0 0.0
    %245 = vmatprep.subr.mxu0 0.0
    %246 = vmatpush2.msra.mxu0 0.0
    %247 = vmatprep.subr.mxu0 0.0
    %248 = vmatpush2.msra.mxu0 0.0
    %249 = vmatprep.subr.mxu0 0.0
    %250 = vmatpush2.msra.mxu0 0.0
    %251 = vmatprep.subr.mxu0 0.0
    %252 = vmatpush2.msra.mxu0 0.0
    %253 = vmatprep.subr.mxu0 0.0
    %254 = vmatpush2.msra.mxu0 0.0
    %255 = vmatprep.subr.mxu0 0.0
    %256 = vmatpush2.msra.mxu0 0.0
    %257 = vmatprep.subr.mxu0 0.0
    %258 = vmatpush2.msra.mxu0 0.0
    %259 = vmatprep.mubr.f32.mxu0 0.0
    %260 = vmatmul.mubr.f32.gmra.mxu0 %v79
    %v261 = vpop.f32.mrf.mxu0
    %v262 = vadd.f32 %v193, %v261
    %v263 = vpop.f32.mrf.mxu0
    %264 = vmatprep.mubr.f32.mxu0 0.0
    %265 = vmatmul.mubr.f32.gmra.mxu0 %v80
    %v266 = vpop.f32.mrf.mxu0
    %v267 = vadd.f32 %v193, %v266
    %v268 = vpop.f32.mrf.mxu0
    %269 = vdwg.mxu0
    %v270 = vmax.f32 %v262, 0.0
    %v271 = vmax.f32 %v267, 0.0
    %v272 = vld [vmem:[#allocation7] sm:$0xff]
    %v273 = vld [vmem:[#allocation7 + $0x8] sm:$0xff]
    %v274 = vld [vmem:[#allocation7 + $0x10] sm:$0xff]
    %v275 = vld [vmem:[#allocation7 + $0x18] sm:$0xff]
    %v276 = vld [vmem:[#allocation7 + $0x20] sm:$0xff]
    %v277 = vld [vmem:[#allocation7 + $0x28] sm:$0xff]
    %v278 = vld [vmem:[#allocation7 + $0x30] sm:$0xff]
    %v279 = vld [vmem:[#allocation7 + $0x38] sm:$0xff]
    %v280 = vld [vmem:[#allocation7 + $0x40] sm:$0xff]
    %v281 = vld [vmem:[#allocation7 + $0x48] sm:$0xff]
    %v282 = vld [vmem:[#allocation7 + $0x50] sm:$0xff]
    %v283 = vld [vmem:[#allocation7 + $0x58] sm:$0xff]
    %v284 = vld [vmem:[#allocation7 + $0x60] sm:$0xff]
    %v285 = vld [vmem:[#allocation7 + $0x68] sm:$0xff]
    %v286 = vld [vmem:[#allocation7 + $0x70] sm:$0xff]
    %v287 = vld [vmem:[#allocation7 + $0x78] sm:$0xff]
    %v288 = vld [vmem:[%s4] sm:$0x1]
    %v290 = vlaneseq
    %v291 = vshrl.u32 %v290, 7
    %v292 = vsub.s32 0, %v291
    %v293 = vrot.slane %v288, %v292
    %295 = vmatprep.subr.mxu0 0.0
    %296 = vmatpush1.msra.mxu0 %v287
    %297 = vmatprep.subr.mxu0 0.0
    %298 = vmatpush1.msra.mxu0 %v286
    %299 = vmatprep.subr.mxu0 0.0
    %300 = vmatpush1.msra.mxu0 %v285
    %301 = vmatprep.subr.mxu0 0.0
    %302 = vmatpush1.msra.mxu0 %v284
    %303 = vmatprep.subr.mxu0 0.0
    %304 = vmatpush1.msra.mxu0 %v283
    %305 = vmatprep.subr.mxu0 0.0
    %306 = vmatpush1.msra.mxu0 %v282
    %307 = vmatprep.subr.mxu0 0.0
    %308 = vmatpush1.msra.mxu0 %v281
    %309 = vmatprep.subr.mxu0 0.0
    %310 = vmatpush1.msra.mxu0 %v280
    %311 = vmatprep.subr.mxu0 0.0
    %312 = vmatpush1.msra.mxu0 %v279
    %313 = vmatprep.subr.mxu0 0.0
    %314 = vmatpush1.msra.mxu0 %v278
    %315 = vmatprep.subr.mxu0 0.0
    %316 = vmatpush1.msra.mxu0 %v277
    %317 = vmatprep.subr.mxu0 0.0
    %318 = vmatpush1.msra.mxu0 %v276
    %319 = vmatprep.subr.mxu0 0.0
    %320 = vmatpush1.msra.mxu0 %v275
    %321 = vmatprep.subr.mxu0 0.0
    %322 = vmatpush1.msra.mxu0 %v274
    %323 = vmatprep.subr.mxu0 0.0
    %324 = vmatpush1.msra.mxu0 %v273
    %325 = vmatprep.subr.mxu0 0.0
    %326 = vmatpush1.msra.mxu0 %v272
    %327 = vmatprep.subr.mxu0 0.0
    %328 = vmatpush2.msra.mxu0 0.0
    %329 = vmatprep.subr.mxu0 0.0
    %330 = vmatpush2.msra.mxu0 0.0
    %331 = vmatprep.subr.mxu0 0.0
    %332 = vmatpush2.msra.mxu0 0.0
    %333 = vmatprep.subr.mxu0 0.0
    %334 = vmatpush2.msra.mxu0 0.0
    %335 = vmatprep.subr.mxu0 0.0
    %336 = vmatpush2.msra.mxu0 0.0
    %337 = vmatprep.subr.mxu0 0.0
    %338 = vmatpush2.msra.mxu0 0.0
    %339 = vmatprep.subr.mxu0 0.0
    %340 = vmatpush2.msra.mxu0 0.0
    %341 = vmatprep.subr.mxu0 0.0
    %342 = vmatpush2.msra.mxu0 0.0
    %343 = vmatprep.subr.mxu0 0.0
    %344 = vmatpush2.msra.mxu0 0.0
    %345 = vmatprep.subr.mxu0 0.0
    %346 = vmatpush2.msra.mxu0 0.0
    %347 = vmatprep.subr.mxu0 0.0
    %348 = vmatpush2.msra.mxu0 0.0
    %349 = vmatprep.subr.mxu0 0.0
    %350 = vmatpush2.msra.mxu0 0.0
    %351 = vmatprep.subr.mxu0 0.0
    %352 = vmatpush2.msra.mxu0 0.0
    %353 = vmatprep.subr.mxu0 0.0
    %354 = vmatpush2.msra.mxu0 0.0
    %355 = vmatprep.subr.mxu0 0.0
    %356 = vmatpush2.msra.mxu0 0.0
    %357 = vmatprep.subr.mxu0 0.0
    %358 = vmatpush2.msra.mxu0 0.0
    %359 = vmatprep.mubr.f32.mxu0 0.0
    %360 = vmatmul.mubr.f32.gmra.mxu0 %v270
    %v361 = vpop.f32.mrf.mxu0
    %v362 = vadd.f32 %v293, %v361
    %v363 = vpop.f32.mrf.mxu0
    %364 = vmatprep.mubr.f32.mxu0 0.0
    %365 = vmatmul.mubr.f32.gmra.mxu0 %v271
    %v366 = vpop.f32.mrf.mxu0
    %v367 = vadd.f32 %v293, %v366
    %v368 = vpop.f32.mrf.mxu0
    %369 = vdwg.mxu0
    %v370 = vadd.f32 %v362, %v164
    %v371 = vadd.f32 %v367, %v169
    %v372 = vmax.f32 %v370, 0.0
    %v373 = vmax.f32 %v371, 0.0
    %374 = vst [vmem:[#allocation10] sm:$0xff] %v372
    %375 = vst [vmem:[#allocation10 + $0x8] sm:$0xff] %v373
    // Predicated region
    $region42: #{tpu_custom_call.1} parent=1 // pred_check
      _
    $region43: #{tpu_custom_call.1} parent=1 // pred_check_branch
      %377 = sbr.rel (0) target = $region45
    $region44: #{tpu_custom_call.1} parent=1 // pred_region
      %s379 = ssub.s32 256, 256
      %380 = vsyncadd [#allocation4], %s379
      %s381 = sshll.u32 [#allocation10], 4
      %s382 = int_to_ptr.vmem [resolvable:$true] %s381
      %387 = dma.vmem_to_hbm [thread:$0]  %s382, 256, %s6, [#allocation4], 128, 128, 8
    $region45: #{tpu_custom_call.1} parent=1 // pred_fallthru
      _
    // Predicated region
    $region46: #{tpu_custom_call.1} parent=1 // pred_check
      _
    $region47: #{tpu_custom_call.1} parent=1 // pred_check_branch
      %389 = sbr.rel (0) target = $region49
    $region48: #{tpu_custom_call.1} parent=1 // pred_region
      %390 = dma.done [#allocation4], 256
    $region49: #{tpu_custom_call.1} parent=1 // pred_fallthru
      _
    %391 = vsyncpa [#allocation3], 1
    %392 = vsyncpa [#allocation6], 1
    %393 = vsyncpa [#allocation9], 1
    %394 = vsyncpa [#allocation4], 1

</llo_original>
